<compile_context>
chip_gen: v7x
topology: tpu7x:2x2x1
jax: 0.10.0
libtpu: 0.0.40
codegen_flags: <defaults>
</compile_context>

<pallas_src>
import jax
import jax.numpy as jnp
from jax import lax
from jax.experimental import pallas as pl
from jax.experimental.pallas import tpu as pltpu


def _round_up(x, m):
    return (x + m - 1) // m * m


def autorec_kernel(x_ref, w_enc_ref, b_enc_ref, w_dec_ref, b_dec_ref, out_ref):
    # Encoder: contract U axis of x (B, U) against U axis of W_enc (H, U) -> (B, H).
    # dot_general with last-dim contraction feeds the MXU directly (no .T copy),
    # native-dtype operands, f32 accumulation.
    h = lax.dot_general(
        x_ref[...], w_enc_ref[...],
        dimension_numbers=(((1,), (1,)), ((), ())),
        preferred_element_type=jnp.float32,
    )
    h = jax.nn.sigmoid(h + b_enc_ref[...].astype(jnp.float32))
    # TODO(synk): training-mode dropout and `pred * sign(input)` masking are not
    # implemented (eval-path semantics only).

    # Decoder: contract H axis of h (B, H) against H axis of W_dec (U, H) -> (B, U).
    pred = lax.dot_general(
        h.astype(w_dec_ref.dtype), w_dec_ref[...],
        dimension_numbers=(((1,), (1,)), ((), ())),
        preferred_element_type=jnp.float32,
    )
    pred = pred + b_dec_ref[...].astype(jnp.float32)
    out_ref[...] = pred.astype(out_ref.dtype)


def autorec_forward(x, w_enc, b_enc, w_dec, b_dec, *, block_b=None):
    """Fused AutoRec forward. Tiles over batch; weights stay VMEM-resident."""
    batch, num_users = x.shape
    num_hidden = w_enc.shape[0]

    # Lane-align feature dims (multiples of 128) so stores are unmasked and
    # (8,128) tiling is clean. Zero-padding is semantically safe here: padded
    # hidden units see zero decoder weights, padded output columns are sliced off.
    u_pad = _round_up(num_users, 128)
    h_pad = _round_up(num_hidden, 128)

    def pad2(a, rows, cols):
        return jnp.pad(a, ((0, rows - a.shape[0]), (0, cols - a.shape[1])))

    x_p = pad2(x, batch, u_pad)
    w_enc_p = pad2(w_enc, h_pad, u_pad)
    w_dec_p = pad2(w_dec, u_pad, h_pad)
    b_enc_p = jnp.pad(b_enc, (0, h_pad - num_hidden)).reshape(1, h_pad)
    b_dec_p = jnp.pad(b_dec, (0, u_pad - num_users)).reshape(1, u_pad)

    # Batch tile: fill the MXU M dimension and keep the grid >= 2 steps when
    # possible (pipelining + megacore), but never exceed the batch itself.
    if block_b is None:
        block_b = min(batch, 256)
    if block_b < batch:
        block_b = max(8, (block_b // 8) * 8)  # multiple of 8 sublanes (f32)
    else:
        block_b = batch  # block == full dim is always legal

    grid = (pl.cdiv(batch, block_b),)

    # Advisory cost hint for XLA's scheduler around the custom call.
    cost = pl.CostEstimate(
        flops=2 * 2 * batch * num_users * num_hidden,
        transcendentals=batch * num_hidden,
        bytes_accessed=(x_p.size * x_p.dtype.itemsize
                        + w_enc_p.size * w_enc_p.dtype.itemsize
                        + w_dec_p.size * w_dec_p.dtype.itemsize
                        + b_enc_p.size * b_enc_p.dtype.itemsize
                        + b_dec_p.size * b_dec_p.dtype.itemsize
                        + batch * u_pad * x.dtype.itemsize),
    )

    # VMEM budget: (possibly double-buffered) weights + biases + double-buffered
    # x/out tiles, with headroom; clamp to 64 MiB so it is valid on v7x too.
    vmem_needed = (
        2 * (w_enc_p.size * w_enc_p.dtype.itemsize
             + w_dec_p.size * w_dec_p.dtype.itemsize
             + b_enc_p.size * b_enc_p.dtype.itemsize
             + b_dec_p.size * b_dec_p.dtype.itemsize)
        + 2 * block_b * u_pad * (x_p.dtype.itemsize + x.dtype.itemsize)
    )
    vmem_limit = int(min(max(int(vmem_needed * 1.5), 16 * 2**20), 64 * 2**20))

    out_p = pl.pallas_call(
        autorec_kernel,
        out_shape=jax.ShapeDtypeStruct((batch, u_pad), x.dtype),
        grid_spec=pltpu.PrefetchScalarGridSpec(
            num_scalar_prefetch=0,
            grid=grid,
            in_specs=[
                # x: tiled along batch.
                pl.BlockSpec((block_b, u_pad), lambda i: (i, 0)),
                # parameters: same full block every grid step (VMEM resident).
                pl.BlockSpec((h_pad, u_pad), lambda i: (0, 0)),
                pl.BlockSpec((1, h_pad), lambda i: (0, 0)),
                pl.BlockSpec((u_pad, h_pad), lambda i: (0, 0)),
                pl.BlockSpec((1, u_pad), lambda i: (0, 0)),
            ],
            out_specs=pl.BlockSpec((block_b, u_pad), lambda i: (i, 0)),
        ),
        compiler_params=pltpu.CompilerParams(
            dimension_semantics=("parallel",),
            vmem_limit_bytes=vmem_limit,
        ),
        cost_estimate=cost,
    )(x_p, w_enc_p, b_enc_p, w_dec_p, b_dec_p)

    return out_p[:, :num_users]


def autorec_reference(x, w_enc, b_enc, w_dec, b_dec):
    h = jax.nn.sigmoid(x @ w_enc.T + b_enc)
    return h @ w_dec.T + b_dec


if __name__ == "__main__":
    # Small shapes consistent with the module: batch of user-rating rows.
    batch = 8
    num_users = 256   # input/output feature dim of the autoencoder
    num_hidden = 128

    key = jax.random.PRNGKey(0)
    k_x, k_we, k_be, k_wd, k_bd = jax.random.split(key, 5)

    # Deterministic parameter init (uniform, PyTorch-Linear-style fan_in scaling).
    bound_e = 1.0 / (num_users ** 0.5)
    bound_d = 1.0 / (num_hidden ** 0.5)
    x = jax.random.normal(k_x, (batch, num_users), dtype=jnp.float32)
    w_enc = jax.random.uniform(k_we, (num_hidden, num_users), jnp.float32,
                               -bound_e, bound_e)
    b_enc = jax.random.uniform(k_be, (num_hidden,), jnp.float32, -bound_e, bound_e)
    w_dec = jax.random.uniform(k_wd, (num_users, num_hidden), jnp.float32,
                               -bound_d, bound_d)
    b_dec = jax.random.uniform(k_bd, (num_users,), jnp.float32, -bound_d, bound_d)

    pred = autorec_forward(x, w_enc, b_enc, w_dec, b_dec)
    pred = jax.block_until_ready(pred)

    ref = autorec_reference(x, w_enc, b_enc, w_dec, b_dec)
    assert pred.shape == (batch, num_users)
    assert jnp.allclose(pred, ref, atol=1e-5, rtol=1e-5), "mismatch vs JAX reference"

    print("KERNEL_OK")
</pallas_src>

<mosaic_0001>
module attributes {stable_mosaic.version = 11 : i64} {
  func.func @autorec_kernel(%arg0: i32, %arg1: memref<8x256xf32, #tpu.memory_space<vmem>>, %arg2: memref<128x256xf32, #tpu.memory_space<vmem>>, %arg3: memref<1x128xf32, #tpu.memory_space<vmem>>, %arg4: memref<256x128xf32, #tpu.memory_space<vmem>>, %arg5: memref<1x256xf32, #tpu.memory_space<vmem>>, %arg6: memref<8x256xf32, #tpu.memory_space<vmem>>) attributes {dimension_semantics = [#tpu.dimension_semantics<parallel>], iteration_bounds = array<i64: 1>, scalar_prefetch = 0 : i64, scratch_operands = 0 : i64, tpu.core_type = #tpu.core_type<tc>, window_params = [{transform_indices = @transform_0, window_bounds = array<i64: 8, 256>}, {pipeline_mode = #tpu.pipeline_mode<synchronous>, transform_indices = @transform_1, window_bounds = array<i64: 128, 256>}, {pipeline_mode = #tpu.pipeline_mode<synchronous>, transform_indices = @transform_2, window_bounds = array<i64: 1, 128>}, {pipeline_mode = #tpu.pipeline_mode<synchronous>, transform_indices = @transform_3, window_bounds = array<i64: 256, 128>}, {pipeline_mode = #tpu.pipeline_mode<synchronous>, transform_indices = @transform_4, window_bounds = array<i64: 1, 256>}, {transform_indices = @transform_5, window_bounds = array<i64: 8, 256>}]} {
    %c0 = arith.constant 0 : index
    %c0_0 = arith.constant 0 : index
    %0 = vector.load %arg1[%c0, %c0_0] : memref<8x256xf32, #tpu.memory_space<vmem>>, vector<8x256xf32>
    %c0_1 = arith.constant 0 : index
    %c0_2 = arith.constant 0 : index
    %1 = vector.load %arg2[%c0_1, %c0_2] : memref<128x256xf32, #tpu.memory_space<vmem>>, vector<128x256xf32>
    %cst = arith.constant dense<0.000000e+00> : vector<8x128xf32>
    %2 = tpu.matmul %0, %1, %cst {dimension_numbers = #tpu.dot_dimension_numbers<[1], [1], [0], [0], [0, 0, 1, 0], [], []>} : vector<8x256xf32>, vector<128x256xf32>, vector<8x128xf32> -> vector<8x128xf32>
    %c0_3 = arith.constant 0 : index
    %c0_4 = arith.constant 0 : index
    %3 = vector.load %arg3[%c0_3, %c0_4] : memref<1x128xf32, #tpu.memory_space<vmem>>, vector<1x128xf32>
    %4 = vector.broadcast %3 : vector<1x128xf32> to vector<8x128xf32>
    %5 = arith.addf %2, %4 : vector<8x128xf32>
    %6 = arith.negf %5 : vector<8x128xf32>
    %7 = math.exp %6 : vector<8x128xf32>
    %cst_5 = arith.constant 1.000000e+00 : f32
    %8 = vector.broadcast %cst_5 : f32 to vector<8x128xf32>
    %9 = arith.addf %8, %7 : vector<8x128xf32>
    %10 = arith.divf %8, %9 : vector<8x128xf32>
    %c0_6 = arith.constant 0 : index
    %c0_7 = arith.constant 0 : index
    %11 = vector.load %arg4[%c0_6, %c0_7] : memref<256x128xf32, #tpu.memory_space<vmem>>, vector<256x128xf32>
    %cst_8 = arith.constant dense<0.000000e+00> : vector<8x256xf32>
    %12 = tpu.matmul %10, %11, %cst_8 {dimension_numbers = #tpu.dot_dimension_numbers<[1], [1], [0], [0], [0, 0, 1, 0], [], []>} : vector<8x128xf32>, vector<256x128xf32>, vector<8x256xf32> -> vector<8x256xf32>
    %c0_9 = arith.constant 0 : index
    %c0_10 = arith.constant 0 : index
    %13 = vector.load %arg5[%c0_9, %c0_10] : memref<1x256xf32, #tpu.memory_space<vmem>>, vector<1x256xf32>
    %14 = vector.broadcast %13 : vector<1x256xf32> to vector<8x256xf32>
    %15 = arith.addf %12, %14 : vector<8x256xf32>
    %c0_11 = arith.constant 0 : index
    %c0_12 = arith.constant 0 : index
    %16 = vector.load %arg6[%c0_11, %c0_12] : memref<8x256xf32, #tpu.memory_space<vmem>>, vector<8x256xf32>
    tpu.vector_store %arg6[%c0_11, %c0_12], %15 {strides = array<i32>} : memref<8x256xf32, #tpu.memory_space<vmem>>, vector<8x256xf32>,
    return
  }
  func.func @transform_0(%arg0: i32) -> (i32, i32) {
    %c0_i32 = arith.constant 0 : i32
    %c0_i32_0 = arith.constant 0 : i32
    return %arg0, %c0_i32 : i32, i32
  }
  func.func @transform_1(%arg0: i32) -> (i32, i32) {
    %c0_i32 = arith.constant 0 : i32
    %c0_i32_0 = arith.constant 0 : i32
    %c0_i32_1 = arith.constant 0 : i32
    return %c0_i32, %c0_i32_0 : i32, i32
  }
  func.func @transform_2(%arg0: i32) -> (i32, i32) {
    %c0_i32 = arith.constant 0 : i32
    %c0_i32_0 = arith.constant 0 : i32
    %c0_i32_1 = arith.constant 0 : i32
    return %c0_i32, %c0_i32_0 : i32, i32
  }
  func.func @transform_3(%arg0: i32) -> (i32, i32) {
    %c0_i32 = arith.constant 0 : i32
    %c0_i32_0 = arith.constant 0 : i32
    %c0_i32_1 = arith.constant 0 : i32
    return %c0_i32, %c0_i32_0 : i32, i32
  }
  func.func @transform_4(%arg0: i32) -> (i32, i32) {
    %c0_i32 = arith.constant 0 : i32
    %c0_i32_0 = arith.constant 0 : i32
    %c0_i32_1 = arith.constant 0 : i32
    return %c0_i32, %c0_i32_0 : i32, i32
  }
  func.func @transform_5(%arg0: i32) -> (i32, i32) {
    %c0_i32 = arith.constant 0 : i32
    %c0_i32_0 = arith.constant 0 : i32
    return %arg0, %c0_i32 : i32, i32
  }
}

</mosaic_0001>

<llo_original>
// kernel: tpu_custom_call.1
$region0: #{tpu_custom_call.1}
  #allocation0 [shape = 'u32[]', space=smem, size = 0x4, offset = 0x4, fixed_abs, tag = 'smem constant byte address 0x4 - core index']
  #allocation1 [shape = 'u32[144,128]{1,0:T(1,128)}', space=vmem, size = 0x12000, scoped, tag = 'internal scratch']
  %s0 = inlined_call_operand.hbm [shape: f32[8,256], index: 0, kind: input, shape index: {}]
  %s1 = inlined_call_operand.hbm [shape: f32[128,256], index: 1, kind: input, shape index: {}]
  %s2 = inlined_call_operand.vmem [shape: f32[1,128], index: 2, kind: input, shape index: {}]
  %s3 = inlined_call_operand.hbm [shape: f32[256,128], index: 3, kind: input, shape index: {}]
  %s4 = inlined_call_operand.vmem [shape: f32[1,256], index: 4, kind: input, shape index: {}]
  %s5 = inlined_call_operand.hbm [shape: f32[8,256], index: 5, kind: output, shape index: {}]
  %s6 = sld [smem:[#allocation0]]
  $region42: #{tpu_custom_call.1} parent=0
    _
  %s8 = ssub.s32 1, %s6
  %s9 = scalar_select 0, %s8, %s6
  $region1: #{tpu_custom_call.1} parent=0
    #allocation2 [shape = 'u8[8192]{0}', space=vmem, size = 0x2000, scoped, tag = 'input window, operand 0, single buffered']
    #allocation3 [shape = 's32[1]{0}', space=sflag, size = 0x4, scoped, tag = 'scoped memory for tpu_custom_call.1']
    #allocation4 [shape = 's32[1]{0}', space=sflag, size = 0x4, scoped, tag = 'scoped memory for tpu_custom_call.1']
    #allocation5 [shape = 'u8[131072]{0}', space=vmem, size = 0x20000, scoped, tag = 'input window, operand 1, single buffered']
    #allocation6 [shape = 's32[1]{0}', space=sflag, size = 0x4, scoped, tag = 'scoped memory for tpu_custom_call.1']
    #allocation7 [shape = 'u8[131072]{0}', space=vmem, size = 0x20000, scoped, tag = 'input window, operand 3, single buffered']
    #allocation8 [shape = 'u8[8192]{0}', space=vmem, size = 0x2000, scoped, tag = 'output window, operand 0, single buffered']
    %10 = vsyncpa [#allocation3], 0
    %11 = vsyncpa [#allocation6], 0
    %12 = vsyncpa [#allocation4], 0
    // Predicated region
    $region2: #{tpu_custom_call.1} parent=1 // pred_check
      _
    $region3: #{tpu_custom_call.1} parent=1 // pred_check_branch
      %14 = sbr.rel (0) target = $region5
    $region4: #{tpu_custom_call.1} parent=1 // pred_region
      %s16 = ssub.s32 256, 256
      %17 = vsyncadd [#allocation3], %s16
      %s19 = sshll.u32 [#allocation2], 4
      %s20 = int_to_ptr.vmem [resolvable:$true] %s19
      %22 = dma.hbm_to_vmem [thread:$0]  %s0, 256, %s20, [#allocation3]
    $region5: #{tpu_custom_call.1} parent=1 // pred_fallthru
      _
    // Predicated region
    $region6: #{tpu_custom_call.1} parent=1 // pred_check
      _
    $region7: #{tpu_custom_call.1} parent=1 // pred_check_branch
      %24 = sbr.rel (0) target = $region9
    $region8: #{tpu_custom_call.1} parent=1 // pred_region
      %s26 = ssub.s32 4096, 4096
      %27 = vsyncadd [#allocation6], %s26
      %s28 = sshll.u32 [#allocation5], 4
      %s29 = int_to_ptr.vmem [resolvable:$true] %s28
      %34 = dma.hbm_to_vmem [thread:$0]  %s1, 4096, %s29, [#allocation6], 256, 256, 16
    $region9: #{tpu_custom_call.1} parent=1 // pred_fallthru
      _
    // Predicated region
    $region10: #{tpu_custom_call.1} parent=1 // pred_check
      _
    $region11: #{tpu_custom_call.1} parent=1 // pred_check_branch
      %36 = sbr.rel (0) target = $region13
    $region12: #{tpu_custom_call.1} parent=1 // pred_region
      _
    $region13: #{tpu_custom_call.1} parent=1 // pred_fallthru
      _
    // Predicated region
    $region14: #{tpu_custom_call.1} parent=1 // pred_check
      _
    $region15: #{tpu_custom_call.1} parent=1 // pred_check_branch
      %38 = sbr.rel (0) target = $region17
    $region16: #{tpu_custom_call.1} parent=1 // pred_region
      %s40 = ssub.s32 4096, 4096
      %41 = vsyncadd [#allocation6], %s40
      %s42 = sshll.u32 [#allocation7], 4
      %s43 = int_to_ptr.vmem [resolvable:$true] %s42
      %48 = dma.hbm_to_vmem [thread:$0]  %s3, 4096, %s43, [#allocation6], 128, 128, 8
    $region17: #{tpu_custom_call.1} parent=1 // pred_fallthru
      _
    // Predicated region
    $region18: #{tpu_custom_call.1} parent=1 // pred_check
      _
    $region19: #{tpu_custom_call.1} parent=1 // pred_check_branch
      %50 = sbr.rel (0) target = $region21
    $region20: #{tpu_custom_call.1} parent=1 // pred_region
      _
    $region21: #{tpu_custom_call.1} parent=1 // pred_fallthru
      _
    // Predicated region
    $region22: #{tpu_custom_call.1} parent=1 // pred_check
      _
    $region23: #{tpu_custom_call.1} parent=1 // pred_check_branch
      %52 = sbr.rel (0) target = $region25
    $region24: #{tpu_custom_call.1} parent=1 // pred_region
      %53 = dma.done [#allocation3], 256
    $region25: #{tpu_custom_call.1} parent=1 // pred_fallthru
      _
    // Predicated region
    $region26: #{tpu_custom_call.1} parent=1 // pred_check
      _
    $region27: #{tpu_custom_call.1} parent=1 // pred_check_branch
      %55 = sbr.rel (0) target = $region29
    $region28: #{tpu_custom_call.1} parent=1 // pred_region
      %56 = dma.done [#allocation6], 4096
    $region29: #{tpu_custom_call.1} parent=1 // pred_fallthru
      _
    // Predicated region
    $region30: #{tpu_custom_call.1} parent=1 // pred_check
      _
    $region31: #{tpu_custom_call.1} parent=1 // pred_check_branch
      %58 = sbr.rel (0) target = $region33
    $region32: #{tpu_custom_call.1} parent=1 // pred_region
      %59 = dma.done [#allocation6], 4096
    $region33: #{tpu_custom_call.1} parent=1 // pred_fallthru
      _
    %v60 = vld [vmem:[#allocation2] sm:$0xff]
    %v61 = vld [vmem:[#allocation2 + $0x8] sm:$0xff]
    %v62 = vld [vmem:[#allocation5] sm:$0xff]
    %v63 = vld [vmem:[#allocation5 + $0x8] sm:$0xff]
    %v64 = vld [vmem:[#allocation5 + $0x10] sm:$0xff]
    %v65 = vld [vmem:[#allocation5 + $0x18] sm:$0xff]
    %v66 = vld [vmem:[#allocation5 + $0x20] sm:$0xff]
    %v67 = vld [vmem:[#allocation5 + $0x28] sm:$0xff]
    %v68 = vld [vmem:[#allocation5 + $0x30] sm:$0xff]
    %v69 = vld [vmem:[#allocation5 + $0x38] sm:$0xff]
    %v70 = vld [vmem:[#allocation5 + $0x40] sm:$0xff]
    %v71 = vld [vmem:[#allocation5 + $0x48] sm:$0xff]
    %v72 = vld [vmem:[#allocation5 + $0x50] sm:$0xff]
    %v73 = vld [vmem:[#allocation5 + $0x58] sm:$0xff]
    %v74 = vld [vmem:[#allocation5 + $0x60] sm:$0xff]
    %v75 = vld [vmem:[#allocation5 + $0x68] sm:$0xff]
    %v76 = vld [vmem:[#allocation5 + $0x70] sm:$0xff]
    %v77 = vld [vmem:[#allocation5 + $0x78] sm:$0xff]
    %v78 = vld [vmem:[#allocation5 + $0x80] sm:$0xff]
    %v79 = vld [vmem:[#allocation5 + $0x88] sm:$0xff]
    %v80 = vld [vmem:[#allocation5 + $0x90] sm:$0xff]
    %v81 = vld [vmem:[#allocation5 + $0x98] sm:$0xff]
    %v82 = vld [vmem:[#allocation5 + $0xa0] sm:$0xff]
    %v83 = vld [vmem:[#allocation5 + $0xa8] sm:$0xff]
    %v84 = vld [vmem:[#allocation5 + $0xb0] sm:$0xff]
    %v85 = vld [vmem:[#allocation5 + $0xb8] sm:$0xff]
    %v86 = vld [vmem:[#allocation5 + $0xc0] sm:$0xff]
    %v87 = vld [vmem:[#allocation5 + $0xc8] sm:$0xff]
    %v88 = vld [vmem:[#allocation5 + $0xd0] sm:$0xff]
    %v89 = vld [vmem:[#allocation5 + $0xd8] sm:$0xff]
    %v90 = vld [vmem:[#allocation5 + $0xe0] sm:$0xff]
    %v91 = vld [vmem:[#allocation5 + $0xe8] sm:$0xff]
    %v92 = vld [vmem:[#allocation5 + $0xf0] sm:$0xff]
    %v93 = vld [vmem:[#allocation5 + $0xf8] sm:$0xff]
    %v94 = vld [vmem:[%s2] sm:$0x1]
    %v96 = vlaneseq
    %v97 = vshrl.u32 %v96, 7
    %v98 = vsub.s32 0, %v97
    %v99 = vrot.slane %v94, %v98
    %101 = vmatprep.subr.mxu0 %v63
    %102 = vmatpush1.xpose.msra.mxu0 %v62
    %103 = vmatprep.subr.mxu0 %v65
    %104 = vmatpush1.xpose.msra.mxu0 %v64
    %105 = vmatprep.subr.mxu0 %v67
    %106 = vmatpush1.xpose.msra.mxu0 %v66
    %107 = vmatprep.subr.mxu0 %v69
    %108 = vmatpush1.xpose.msra.mxu0 %v68
    %109 = vmatprep.subr.mxu0 %v71
    %110 = vmatpush1.xpose.msra.mxu0 %v70
    %111 = vmatprep.subr.mxu0 %v73
    %112 = vmatpush1.xpose.msra.mxu0 %v72
    %113 = vmatprep.subr.mxu0 %v75
    %114 = vmatpush1.xpose.msra.mxu0 %v74
    %115 = vmatprep.subr.mxu0 %v77
    %116 = vmatpush1.xpose.msra.mxu0 %v76
    %117 = vmatprep.subr.mxu0 %v79
    %118 = vmatpush1.xpose.msra.mxu0 %v78
    %119 = vmatprep.subr.mxu0 %v81
    %120 = vmatpush1.xpose.msra.mxu0 %v80
    %121 = vmatprep.subr.mxu0 %v83
    %122 = vmatpush1.xpose.msra.mxu0 %v82
    %123 = vmatprep.subr.mxu0 %v85
    %124 = vmatpush1.xpose.msra.mxu0 %v84
    %125 = vmatprep.subr.mxu0 %v87
    %126 = vmatpush1.xpose.msra.mxu0 %v86
    %127 = vmatprep.subr.mxu0 %v89
    %128 = vmatpush1.xpose.msra.mxu0 %v88
    %129 = vmatprep.subr.mxu0 %v91
    %130 = vmatpush1.xpose.msra.mxu0 %v90
    %131 = vmatprep.subr.mxu0 %v93
    %132 = vmatpush1.xpose.msra.mxu0 %v92
    %133 = vmatprep.subr.mxu0 0.0
    %134 = vmatpush1.xpose.msra.mxu0 0.0
    %135 = vmatprep.subr.mxu0 0.0
    %136 = vmatpush1.xpose.msra.mxu0 0.0
    %137 = vmatprep.subr.mxu0 0.0
    %138 = vmatpush1.xpose.msra.mxu0 0.0
    %139 = vmatprep.subr.mxu0 0.0
    %140 = vmatpush1.xpose.msra.mxu0 0.0
    %141 = vmatprep.subr.mxu0 0.0
    %142 = vmatpush1.xpose.msra.mxu0 0.0
    %143 = vmatprep.subr.mxu0 0.0
    %144 = vmatpush1.xpose.msra.mxu0 0.0
    %145 = vmatprep.subr.mxu0 0.0
    %146 = vmatpush1.xpose.msra.mxu0 0.0
    %147 = vmatprep.subr.mxu0 0.0
    %148 = vmatpush1.xpose.msra.mxu0 0.0
    %149 = vmatprep.subr.mxu0 0.0
    %150 = vmatpush1.xpose.msra.mxu0 0.0
    %151 = vmatprep.subr.mxu0 0.0
    %152 = vmatpush1.xpose.msra.mxu0 0.0
    %153 = vmatprep.subr.mxu0 0.0
    %154 = vmatpush1.xpose.msra.mxu0 0.0
    %155 = vmatprep.subr.mxu0 0.0
    %156 = vmatpush1.xpose.msra.mxu0 0.0
    %157 = vmatprep.subr.mxu0 0.0
    %158 = vmatpush1.xpose.msra.mxu0 0.0
    %159 = vmatprep.subr.mxu0 0.0
    %160 = vmatpush1.xpose.msra.mxu0 0.0
    %161 = vmatprep.subr.mxu0 0.0
    %162 = vmatpush1.xpose.msra.mxu0 0.0
    %163 = vmatprep.subr.mxu0 0.0
    %164 = vmatpush1.xpose.msra.mxu0 0.0
    %165 = vmatprep.mubr.f32.mxu0 %v61
    %166 = vmatmul.mubr.f32.gmra.mrb[0].mxu0 %v60
    %v167 = vpop.f32.mrb[0].mxu0
    %v168 = vadd.f32 %v99, %v167
    %v169 = vpop.f32.mrb[0].mxu0
    %170 = vdwg.mxu0
    %v171 = vxor.u32 %v168, 2147483648
    %v172 = vmul.f32 %v171, 1.442695
    %v173 = vpow.pop %v172
    %v174 = vadd.f32 %v173, 1.0
    %v175 = vrcp.pop %v174
    %v176 = vmul.f32 1.0, %v175
    %v177 = vld [vmem:[#allocation7] sm:$0xff]
    %v178 = vld [vmem:[#allocation7 + $0x8] sm:$0xff]
    %v179 = vld [vmem:[#allocation7 + $0x10] sm:$0xff]
    %v180 = vld [vmem:[#allocation7 + $0x18] sm:$0xff]
    %v181 = vld [vmem:[#allocation7 + $0x20] sm:$0xff]
    %v182 = vld [vmem:[#allocation7 + $0x28] sm:$0xff]
    %v183 = vld [vmem:[#allocation7 + $0x30] sm:$0xff]
    %v184 = vld [vmem:[#allocation7 + $0x38] sm:$0xff]
    %v185 = vld [vmem:[#allocation7 + $0x40] sm:$0xff]
    %v186 = vld [vmem:[#allocation7 + $0x48] sm:$0xff]
    %v187 = vld [vmem:[#allocation7 + $0x50] sm:$0xff]
    %v188 = vld [vmem:[#allocation7 + $0x58] sm:$0xff]
    %v189 = vld [vmem:[#allocation7 + $0x60] sm:$0xff]
    %v190 = vld [vmem:[#allocation7 + $0x68] sm:$0xff]
    %v191 = vld [vmem:[#allocation7 + $0x70] sm:$0xff]
    %v192 = vld [vmem:[#allocation7 + $0x78] sm:$0xff]
    %v193 = vld [vmem:[#allocation7 + $0x80] sm:$0xff]
    %v194 = vld [vmem:[#allocation7 + $0x88] sm:$0xff]
    %v195 = vld [vmem:[#allocation7 + $0x90] sm:$0xff]
    %v196 = vld [vmem:[#allocation7 + $0x98] sm:$0xff]
    %v197 = vld [vmem:[#allocation7 + $0xa0] sm:$0xff]
    %v198 = vld [vmem:[#allocation7 + $0xa8] sm:$0xff]
    %v199 = vld [vmem:[#allocation7 + $0xb0] sm:$0xff]
    %v200 = vld [vmem:[#allocation7 + $0xb8] sm:$0xff]
    %v201 = vld [vmem:[#allocation7 + $0xc0] sm:$0xff]
    %v202 = vld [vmem:[#allocation7 + $0xc8] sm:$0xff]
    %v203 = vld [vmem:[#allocation7 + $0xd0] sm:$0xff]
    %v204 = vld [vmem:[#allocation7 + $0xd8] sm:$0xff]
    %v205 = vld [vmem:[#allocation7 + $0xe0] sm:$0xff]
    %v206 = vld [vmem:[#allocation7 + $0xe8] sm:$0xff]
    %v207 = vld [vmem:[#allocation7 + $0xf0] sm:$0xff]
    %v208 = vld [vmem:[#allocation7 + $0xf8] sm:$0xff]
    %v209 = vld [vmem:[%s4] sm:$0x3]
    %v211 = vlaneseq
    %v212 = vshrl.u32 %v211, 7
    %v213 = vsub.s32 0, %v212
    %v214 = vrot.slane %v209, %v213
    %v215 = vlaneseq
    %v216 = vshrl.u32 %v215, 7
    %v217 = vsub.s32 1, %v216
    %v218 = vrot.slane %v209, %v217
    %221 = vmatprep.subr.mxu0 0.0
    %222 = vmatpush1.xpose.msra.mxu0 %v177
    %223 = vmatprep.subr.mxu0 0.0
    %224 = vmatpush1.xpose.msra.mxu0 %v178
    %225 = vmatprep.subr.mxu0 0.0
    %226 = vmatpush1.xpose.msra.mxu0 %v179
    %227 = vmatprep.subr.mxu0 0.0
    %228 = vmatpush1.xpose.msra.mxu0 %v180
    %229 = vmatprep.subr.mxu0 0.0
    %230 = vmatpush1.xpose.msra.mxu0 %v181
    %231 = vmatprep.subr.mxu0 0.0
    %232 = vmatpush1.xpose.msra.mxu0 %v182
    %233 = vmatprep.subr.mxu0 0.0
    %234 = vmatpush1.xpose.msra.mxu0 %v183
    %235 = vmatprep.subr.mxu0 0.0
    %236 = vmatpush1.xpose.msra.mxu0 %v184
    %237 = vmatprep.subr.mxu0 0.0
    %238 = vmatpush1.xpose.msra.mxu0 %v185
    %239 = vmatprep.subr.mxu0 0.0
    %240 = vmatpush1.xpose.msra.mxu0 %v186
    %241 = vmatprep.subr.mxu0 0.0
    %242 = vmatpush1.xpose.msra.mxu0 %v187
    %243 = vmatprep.subr.mxu0 0.0
    %244 = vmatpush1.xpose.msra.mxu0 %v188
    %245 = vmatprep.subr.mxu0 0.0
    %246 = vmatpush1.xpose.msra.mxu0 %v189
    %247 = vmatprep.subr.mxu0 0.0
    %248 = vmatpush1.xpose.msra.mxu0 %v190
    %249 = vmatprep.subr.mxu0 0.0
    %250 = vmatpush1.xpose.msra.mxu0 %v191
    %251 = vmatprep.subr.mxu0 0.0
    %252 = vmatpush1.xpose.msra.mxu0 %v192
    %253 = vmatprep.subr.mxu0 0.0
    %254 = vmatpush1.xpose.msra.mxu0 %v193
    %255 = vmatprep.subr.mxu0 0.0
    %256 = vmatpush1.xpose.msra.mxu0 %v194
    %257 = vmatprep.subr.mxu0 0.0
    %258 = vmatpush1.xpose.msra.mxu0 %v195
    %259 = vmatprep.subr.mxu0 0.0
    %260 = vmatpush1.xpose.msra.mxu0 %v196
    %261 = vmatprep.subr.mxu0 0.0
    %262 = vmatpush1.xpose.msra.mxu0 %v197
    %263 = vmatprep.subr.mxu0 0.0
    %264 = vmatpush1.xpose.msra.mxu0 %v198
    %265 = vmatprep.subr.mxu0 0.0
    %266 = vmatpush1.xpose.msra.mxu0 %v199
    %267 = vmatprep.subr.mxu0 0.0
    %268 = vmatpush1.xpose.msra.mxu0 %v200
    %269 = vmatprep.subr.mxu0 0.0
    %270 = vmatpush1.xpose.msra.mxu0 %v201
    %271 = vmatprep.subr.mxu0 0.0
    %272 = vmatpush1.xpose.msra.mxu0 %v202
    %273 = vmatprep.subr.mxu0 0.0
    %274 = vmatpush1.xpose.msra.mxu0 %v203
    %275 = vmatprep.subr.mxu0 0.0
    %276 = vmatpush1.xpose.msra.mxu0 %v204
    %277 = vmatprep.subr.mxu0 0.0
    %278 = vmatpush1.xpose.msra.mxu0 %v205
    %279 = vmatprep.subr.mxu0 0.0
    %280 = vmatpush1.xpose.msra.mxu0 %v206
    %281 = vmatprep.subr.mxu0 0.0
    %282 = vmatpush1.xpose.msra.mxu0 %v207
    %283 = vmatprep.subr.mxu0 0.0
    %284 = vmatpush1.xpose.msra.mxu0 %v208
    %285 = vmatprep.mubr.f32.mxu0 0.0
    %286 = vmatmul.mubr.f32.gmra.mrb[0].mxu0 %v176
    %v287 = vpop.f32.mrb[0].mxu0
    %v288 = vadd.f32 %v214, %v287
    %v289 = vpop.f32.mrb[0].mxu0
    %v290 = vadd.f32 %v218, %v289
    %291 = vdwg.mxu0
    %292 = vst [vmem:[#allocation8] sm:$0xff] %v288
    %293 = vst [vmem:[#allocation8 + $0x8] sm:$0xff] %v290
    // Predicated region
    $region34: #{tpu_custom_call.1} parent=1 // pred_check
      _
    $region35: #{tpu_custom_call.1} parent=1 // pred_check_branch
      %295 = sbr.rel (0) target = $region37
    $region36: #{tpu_custom_call.1} parent=1 // pred_region
      %s297 = ssub.s32 256, 256
      %298 = vsyncadd [#allocation4], %s297
      %s300 = sshll.u32 [#allocation8], 4
      %s301 = int_to_ptr.vmem [resolvable:$true] %s300
      %303 = dma.vmem_to_hbm [thread:$0]  %s301, 256, %s5, [#allocation4]
    $region37: #{tpu_custom_call.1} parent=1 // pred_fallthru
      _
    // Predicated region
    $region38: #{tpu_custom_call.1} parent=1 // pred_check
      _
    $region39: #{tpu_custom_call.1} parent=1 // pred_check_branch
      %305 = sbr.rel (0) target = $region41
    $region40: #{tpu_custom_call.1} parent=1 // pred_region
      %306 = dma.done [#allocation4], 256
    $region41: #{tpu_custom_call.1} parent=1 // pred_fallthru
      _
    %307 = vsyncpa [#allocation3], 1
    %308 = vsyncpa [#allocation6], 1
    %309 = vsyncpa [#allocation4], 1

</llo_original>
